<compile_context>
chip_gen: v7x
topology: tpu7x:2x2x1
jax: 0.10.0
libtpu: 0.0.40
codegen_flags: <defaults>
</compile_context>

<pallas_src>
import jax
import jax.numpy as jnp
from jax.experimental import pallas as pl
from jax.experimental.pallas import tpu as pltpu

# ----------------------------- configuration ------------------------------
PATCH = (2, 4, 4)          # (pt, ph, pw)  (small version of [4, 8, 8])
INP_DIM = 3
DIM = 32                   # small version of 512
Z_DIM = 4
LN_EPS = 1e-5
TM_MAX = 1024              # token-row tile per grid step (lane-aligned)
COMPUTE_DTYPE = jnp.bfloat16   # input/weight dtype for the big matmul


def _round_up(x, m):
    return (x + m - 1) // m * m


# ------------------------------ Pallas kernel ------------------------------
def vae_fused_kernel(x_ref, wp_ref, bp_ref, g_in_ref, b_in_ref,
                     g_out_ref, b_out_ref, wd_ref, bd_ref, o_ref):
    """z^T = LN_out(LN_in(x @ Wp + bp)) @ Wd + bd  for one row tile."""
    # hoisted parameter loads (all f32)
    bp = bp_ref[...].astype(jnp.float32)        # (1, D)
    g_in = g_in_ref[...].astype(jnp.float32)    # (1, D)
    bt_in = b_in_ref[...].astype(jnp.float32)   # (1, D)
    g_out = g_out_ref[...].astype(jnp.float32)  # (1, D)
    bt_out = b_out_ref[...].astype(jnp.float32) # (1, D)
    wd = wd_ref[...].astype(jnp.float32)        # (Z, D)
    bd = bd_ref[...].astype(jnp.float32)        # (Z, 1)

    # patchify linear: bf16 operands on the MXU, f32 accumulation
    y = jnp.dot(x_ref[...], wp_ref[...],
                preferred_element_type=jnp.float32) + bp       # (TM, D) f32

    # input LayerNorm (biased variance, matches nn.LayerNorm)
    mu = jnp.mean(y, axis=-1, keepdims=True)
    var = jnp.mean(jnp.square(y - mu), axis=-1, keepdims=True)
    h = (y - mu) * jax.lax.rsqrt(var + LN_EPS) * g_in + bt_in

    # TODO(synk): residual transformer blocks (block_config/mlp_block_config
    # default to None) are omitted -> identity between the two layernorms.

    # output LayerNorm
    mu2 = jnp.mean(h, axis=-1, keepdims=True)
    var2 = jnp.mean(jnp.square(h - mu2), axis=-1, keepdims=True)
    h2 = (h - mu2) * jax.lax.rsqrt(var2 + LN_EPS) * g_out + bt_out

    # decoder, computed transposed so the (large) M axis lands on lanes:
    #   z^T[z, m] = sum_d W_dec^T[z, d] * h2[m, d]
    zt = jax.lax.dot_general(
        wd, h2,
        dimension_numbers=(((1,), (1,)), ((), ())),
        preferred_element_type=jnp.float32)                    # (Z, TM)
    o_ref[...] = (zt + bd).astype(o_ref.dtype)


# ------------------------------- wrapper -----------------------------------
def _fused_vae_call(tokens, wp, bp, g_in, b_in, g_out, b_out, wd_t, bd_col, tm):
    m_pad, p = tokens.shape
    d = wp.shape[1]
    z = wd_t.shape[0]
    return pl.pallas_call(
        vae_fused_kernel,
        out_shape=jax.ShapeDtypeStruct((z, m_pad), jnp.float32),
        grid=(m_pad // tm,),
        in_specs=[
            pl.BlockSpec((tm, p), lambda i: (i, 0)),    # tokens (bf16)
            pl.BlockSpec((p, d), lambda i: (0, 0)),     # W_patch (bf16)
            pl.BlockSpec((1, d), lambda i: (0, 0)),     # b_patch
            pl.BlockSpec((1, d), lambda i: (0, 0)),     # ln_in gamma
            pl.BlockSpec((1, d), lambda i: (0, 0)),     # ln_in beta
            pl.BlockSpec((1, d), lambda i: (0, 0)),     # ln_out gamma
            pl.BlockSpec((1, d), lambda i: (0, 0)),     # ln_out beta
            pl.BlockSpec((z, d), lambda i: (0, 0)),     # W_dec^T
            pl.BlockSpec((z, 1), lambda i: (0, 0)),     # b_dec (column)
        ],
        out_specs=pl.BlockSpec((z, tm), lambda i: (0, i)),
        compiler_params=pltpu.CompilerParams(
            dimension_semantics=("parallel",)),
    )(tokens, wp, bp, g_in, b_in, g_out, b_out, wd_t, bd_col)


def video_vae_forward(x, params):
    """x: [B, C, F, H, W] (matches the PyTorch module's input convention)."""
    pt, ph, pw = PATCH
    B, C, F, H, W = x.shape

    # pad_video_frames: prepend (pt - 1) all-zero frames (lax.pad via jnp.pad).
    pad_frames = pt - 1
    if pad_frames > 0:
        x = jnp.pad(x, ((0, 0), (0, 0), (pad_frames, 0), (0, 0), (0, 0)))
    Fp = x.shape[2]
    assert Fp % pt == 0 and H % ph == 0 and W % pw == 0
    f, h, w = Fp // pt, H // ph, W // pw

    # Rearrange 'b c (f pt) (h ph) (w pw) -> b (f h w) (pt ph pw c)'.
    # TODO(synk): pure layout glue; folding it into the kernel (index_map
    # gather / allow_input_fusion) would remove one extra HBM copy of the video.
    xr = x.reshape(B, C, f, pt, h, ph, w, pw)
    xr = jnp.transpose(xr, (0, 2, 4, 6, 3, 5, 7, 1))    # b f h w pt ph pw c
    P = pt * ph * pw * C
    N = f * h * w
    M = B * N
    tokens = xr.reshape(M, P).astype(COMPUTE_DTYPE)     # [M, P] bf16

    # Row tile: as large as practical, lane-aligned; pad M to a tile multiple
    # so no trailing rows are dropped.  Padded rows produce finite garbage
    # (sliced off below); no NaNs since var + eps > 0.
    tm = min(TM_MAX, _round_up(M, 128))
    m_pad = _round_up(M, tm)
    if m_pad != M:
        tokens = jnp.pad(tokens, ((0, m_pad - M), (0, 0)))

    zt = _fused_vae_call(
        tokens,
        params["w_patch"].astype(COMPUTE_DTYPE),
        params["b_patch"],
        params["ln_in_gamma"], params["ln_in_beta"],
        params["ln_out_gamma"], params["ln_out_beta"],
        params["w_dec"].T,                               # (Z, D)
        params["b_dec"].T,                               # (Z, 1)
        tm)

    # (Z, M_pad) -> (B, N, Z); the final transpose touches only M*Z elements.
    return zt[:, :M].T.reshape(B, N, Z_DIM)


def init_params(key):
    pt, ph, pw = PATCH
    P = pt * ph * pw * INP_DIM
    k1, k2, k3, k4 = jax.random.split(key, 4)
    return {
        "w_patch": jax.random.normal(k1, (P, DIM), jnp.float32) * 0.02,
        "b_patch": jax.random.normal(k2, (1, DIM), jnp.float32) * 0.01,
        "ln_in_gamma": jnp.ones((1, DIM), jnp.float32),
        "ln_in_beta": jnp.zeros((1, DIM), jnp.float32),
        "ln_out_gamma": jnp.ones((1, DIM), jnp.float32),
        "ln_out_beta": jnp.zeros((1, DIM), jnp.float32),
        "w_dec": jax.random.normal(k3, (DIM, Z_DIM), jnp.float32) * 0.02,
        "b_dec": jax.random.normal(k4, (1, Z_DIM), jnp.float32) * 0.01,
    }


if __name__ == "__main__":
    key = jax.random.PRNGKey(0)
    kx, kp = jax.random.split(key)

    # [B, C, F, H, W]; F=3 so the padded F (= 3 + pt - 1 = 4) divides pt=2.
    x = jax.random.normal(kx, (2, 3, 3, 16, 16), jnp.float32)
    params = init_params(kp)

    out = jax.jit(video_vae_forward)(x, params)
    out = jax.block_until_ready(out)

    # Pure-JAX reference of the same math (same bf16 rounding on the inputs
    # of the big matmul, f32 everywhere else).
    pt, ph, pw = PATCH
    B, C, F, H, W = x.shape
    xp = jnp.pad(x, ((0, 0), (0, 0), (pt - 1, 0), (0, 0), (0, 0)))
    f, h, w = xp.shape[2] // pt, H // ph, W // pw
    t = xp.reshape(B, C, f, pt, h, ph, w, pw).transpose(0, 2, 4, 6, 3, 5, 7, 1)
    t = t.reshape(B * f * h * w, pt * ph * pw * C)
    tb = t.astype(COMPUTE_DTYPE).astype(jnp.float32)
    wb = params["w_patch"].astype(COMPUTE_DTYPE).astype(jnp.float32)
    y = tb @ wb + params["b_patch"]
    y = (y - y.mean(-1, keepdims=True)) * jax.lax.rsqrt(
        y.var(-1, keepdims=True) + LN_EPS)
    y = y * params["ln_in_gamma"] + params["ln_in_beta"]
    yo = (y - y.mean(-1, keepdims=True)) * jax.lax.rsqrt(
        y.var(-1, keepdims=True) + LN_EPS)
    yo = yo * params["ln_out_gamma"] + params["ln_out_beta"]
    ref = (yo @ params["w_dec"] + params["b_dec"]).reshape(B, f * h * w, Z_DIM)

    assert out.shape == (B, f * h * w, Z_DIM), out.shape
    err = float(jnp.max(jnp.abs(out - ref)))
    assert err < 2e-2, f"max abs err {err}"
    print("KERNEL_OK")
</pallas_src>

<mosaic_0001>
module attributes {stable_mosaic.version = 11 : i64} {
  func.func @vae_fused_kernel(%arg0: i32, %arg1: memref<128x96xbf16, #tpu.memory_space<vmem>>, %arg2: memref<96x32xbf16, #tpu.memory_space<vmem>>, %arg3: memref<1x32xf32, #tpu.memory_space<vmem>>, %arg4: memref<1x32xf32, #tpu.memory_space<vmem>>, %arg5: memref<1x32xf32, #tpu.memory_space<vmem>>, %arg6: memref<1x32xf32, #tpu.memory_space<vmem>>, %arg7: memref<1x32xf32, #tpu.memory_space<vmem>>, %arg8: memref<4x32xf32, #tpu.memory_space<vmem>>, %arg9: memref<4x1xf32, #tpu.memory_space<vmem>>, %arg10: memref<4x128xf32, #tpu.memory_space<vmem>>) attributes {dimension_semantics = [#tpu.dimension_semantics<parallel>], iteration_bounds = array<i64: 1>, scalar_prefetch = 0 : i64, scratch_operands = 0 : i64, tpu.core_type = #tpu.core_type<tc>, window_params = [{transform_indices = @transform_0, window_bounds = array<i64: 128, 96>}, {pipeline_mode = #tpu.pipeline_mode<synchronous>, transform_indices = @transform_1, window_bounds = array<i64: 96, 32>}, {pipeline_mode = #tpu.pipeline_mode<synchronous>, transform_indices = @transform_2, window_bounds = array<i64: 1, 32>}, {pipeline_mode = #tpu.pipeline_mode<synchronous>, transform_indices = @transform_3, window_bounds = array<i64: 1, 32>}, {pipeline_mode = #tpu.pipeline_mode<synchronous>, transform_indices = @transform_4, window_bounds = array<i64: 1, 32>}, {pipeline_mode = #tpu.pipeline_mode<synchronous>, transform_indices = @transform_5, window_bounds = array<i64: 1, 32>}, {pipeline_mode = #tpu.pipeline_mode<synchronous>, transform_indices = @transform_6, window_bounds = array<i64: 1, 32>}, {pipeline_mode = #tpu.pipeline_mode<synchronous>, transform_indices = @transform_7, window_bounds = array<i64: 4, 32>}, {pipeline_mode = #tpu.pipeline_mode<synchronous>, transform_indices = @transform_8, window_bounds = array<i64: 4, 1>}, {transform_indices = @transform_9, window_bounds = array<i64: 4, 128>}]} {
    %c0 = arith.constant 0 : index
    %c0_0 = arith.constant 0 : index
    %0 = vector.load %arg3[%c0, %c0_0] : memref<1x32xf32, #tpu.memory_space<vmem>>, vector<1x32xf32>
    %c0_1 = arith.constant 0 : index
    %c0_2 = arith.constant 0 : index
    %1 = vector.load %arg4[%c0_1, %c0_2] : memref<1x32xf32, #tpu.memory_space<vmem>>, vector<1x32xf32>
    %c0_3 = arith.constant 0 : index
    %c0_4 = arith.constant 0 : index
    %2 = vector.load %arg5[%c0_3, %c0_4] : memref<1x32xf32, #tpu.memory_space<vmem>>, vector<1x32xf32>
    %c0_5 = arith.constant 0 : index
    %c0_6 = arith.constant 0 : index
    %3 = vector.load %arg6[%c0_5, %c0_6] : memref<1x32xf32, #tpu.memory_space<vmem>>, vector<1x32xf32>
    %c0_7 = arith.constant 0 : index
    %c0_8 = arith.constant 0 : index
    %4 = vector.load %arg7[%c0_7, %c0_8] : memref<1x32xf32, #tpu.memory_space<vmem>>, vector<1x32xf32>
    %c0_9 = arith.constant 0 : index
    %c0_10 = arith.constant 0 : index
    %5 = vector.load %arg8[%c0_9, %c0_10] : memref<4x32xf32, #tpu.memory_space<vmem>>, vector<4x32xf32>
    %c0_11 = arith.constant 0 : index
    %c0_12 = arith.constant 0 : index
    %6 = vector.load %arg9[%c0_11, %c0_12] : memref<4x1xf32, #tpu.memory_space<vmem>>, vector<4x1xf32>
    %c0_13 = arith.constant 0 : index
    %c0_14 = arith.constant 0 : index
    %7 = vector.load %arg1[%c0_13, %c0_14] : memref<128x96xbf16, #tpu.memory_space<vmem>>, vector<128x96xbf16>
    %c0_15 = arith.constant 0 : index
    %c0_16 = arith.constant 0 : index
    %8 = vector.load %arg2[%c0_15, %c0_16] : memref<96x32xbf16, #tpu.memory_space<vmem>>, vector<96x32xbf16>
    %cst = arith.constant dense<0.000000e+00> : vector<128x32xf32>
    %9 = tpu.matmul %7, %8, %cst {dimension_numbers = #tpu.dot_dimension_numbers<[1], [0], [0], [1], [0, 0, 1, 1], [], []>} : vector<128x96xbf16>, vector<96x32xbf16>, vector<128x32xf32> -> vector<128x32xf32>
    %10 = vector.broadcast %0 : vector<1x32xf32> to vector<128x32xf32>
    %11 = arith.addf %9, %10 : vector<128x32xf32>
    %cst_17 = arith.constant dense<0.000000e+00> : vector<128xf32>
    %12 = vector.multi_reduction <add>, %11, %cst_17 [1] : vector<128x32xf32> to vector<128xf32>
    %13 = vector.shape_cast %12 : vector<128xf32> to vector<128x1xf32>
    %cst_18 = arith.constant 3.200000e+01 : f32
    %14 = vector.broadcast %cst_18 : f32 to vector<128x1xf32>
    %15 = arith.divf %13, %14 : vector<128x1xf32>
    %16 = vector.broadcast %15 : vector<128x1xf32> to vector<128x32xf32>
    %17 = arith.subf %11, %16 : vector<128x32xf32>
    %18 = arith.mulf %17, %17 : vector<128x32xf32>
    %cst_19 = arith.constant dense<0.000000e+00> : vector<128xf32>
    %19 = vector.multi_reduction <add>, %18, %cst_19 [1] : vector<128x32xf32> to vector<128xf32>
    %20 = vector.shape_cast %19 : vector<128xf32> to vector<128x1xf32>
    %cst_20 = arith.constant 3.200000e+01 : f32
    %21 = vector.broadcast %cst_20 : f32 to vector<128x1xf32>
    %22 = arith.divf %20, %21 : vector<128x1xf32>
    %23 = vector.broadcast %15 : vector<128x1xf32> to vector<128x32xf32>
    %24 = arith.subf %11, %23 : vector<128x32xf32>
    %cst_21 = arith.constant 9.99999974E-6 : f32
    %25 = vector.broadcast %cst_21 : f32 to vector<128x1xf32>
    %26 = arith.addf %22, %25 : vector<128x1xf32>
    %27 = math.rsqrt %26 : vector<128x1xf32>
    %28 = vector.broadcast %27 : vector<128x1xf32> to vector<128x32xf32>
    %29 = arith.mulf %24, %28 : vector<128x32xf32>
    %30 = vector.broadcast %1 : vector<1x32xf32> to vector<128x32xf32>
    %31 = arith.mulf %29, %30 : vector<128x32xf32>
    %32 = vector.broadcast %2 : vector<1x32xf32> to vector<128x32xf32>
    %33 = arith.addf %31, %32 : vector<128x32xf32>
    %cst_22 = arith.constant dense<0.000000e+00> : vector<128xf32>
    %34 = vector.multi_reduction <add>, %33, %cst_22 [1] : vector<128x32xf32> to vector<128xf32>
    %35 = vector.shape_cast %34 : vector<128xf32> to vector<128x1xf32>
    %cst_23 = arith.constant 3.200000e+01 : f32
    %36 = vector.broadcast %cst_23 : f32 to vector<128x1xf32>
    %37 = arith.divf %35, %36 : vector<128x1xf32>
    %38 = vector.broadcast %37 : vector<128x1xf32> to vector<128x32xf32>
    %39 = arith.subf %33, %38 : vector<128x32xf32>
    %40 = arith.mulf %39, %39 : vector<128x32xf32>
    %cst_24 = arith.constant dense<0.000000e+00> : vector<128xf32>
    %41 = vector.multi_reduction <add>, %40, %cst_24 [1] : vector<128x32xf32> to vector<128xf32>
    %42 = vector.shape_cast %41 : vector<128xf32> to vector<128x1xf32>
    %cst_25 = arith.constant 3.200000e+01 : f32
    %43 = vector.broadcast %cst_25 : f32 to vector<128x1xf32>
    %44 = arith.divf %42, %43 : vector<128x1xf32>
    %45 = vector.broadcast %37 : vector<128x1xf32> to vector<128x32xf32>
    %46 = arith.subf %33, %45 : vector<128x32xf32>
    %cst_26 = arith.constant 9.99999974E-6 : f32
    %47 = vector.broadcast %cst_26 : f32 to vector<128x1xf32>
    %48 = arith.addf %44, %47 : vector<128x1xf32>
    %49 = math.rsqrt %48 : vector<128x1xf32>
    %50 = vector.broadcast %49 : vector<128x1xf32> to vector<128x32xf32>
    %51 = arith.mulf %46, %50 : vector<128x32xf32>
    %52 = vector.broadcast %3 : vector<1x32xf32> to vector<128x32xf32>
    %53 = arith.mulf %51, %52 : vector<128x32xf32>
    %54 = vector.broadcast %4 : vector<1x32xf32> to vector<128x32xf32>
    %55 = arith.addf %53, %54 : vector<128x32xf32>
    %cst_27 = arith.constant dense<0.000000e+00> : vector<4x128xf32>
    %56 = tpu.matmul %5, %55, %cst_27 {dimension_numbers = #tpu.dot_dimension_numbers<[1], [1], [0], [0], [0, 0, 1, 0], [], []>} : vector<4x32xf32>, vector<128x32xf32>, vector<4x128xf32> -> vector<4x128xf32>
    %57 = vector.broadcast %6 : vector<4x1xf32> to vector<4x128xf32>
    %58 = arith.addf %56, %57 : vector<4x128xf32>
    %c0_28 = arith.constant 0 : index
    %c0_29 = arith.constant 0 : index
    %59 = vector.load %arg10[%c0_28, %c0_29] : memref<4x128xf32, #tpu.memory_space<vmem>>, vector<4x128xf32>
    tpu.vector_store %arg10[%c0_28, %c0_29], %58 {strides = array<i32>} : memref<4x128xf32, #tpu.memory_space<vmem>>, vector<4x128xf32>,
    return
  }
  func.func @transform_0(%arg0: i32) -> (i32, i32) {
    %c0_i32 = arith.constant 0 : i32
    %c0_i32_0 = arith.constant 0 : i32
    return %arg0, %c0_i32 : i32, i32
  }
  func.func @transform_1(%arg0: i32) -> (i32, i32) {
    %c0_i32 = arith.constant 0 : i32
    %c0_i32_0 = arith.constant 0 : i32
    %c0_i32_1 = arith.constant 0 : i32
    return %c0_i32, %c0_i32_0 : i32, i32
  }
  func.func @transform_2(%arg0: i32) -> (i32, i32) {
    %c0_i32 = arith.constant 0 : i32
    %c0_i32_0 = arith.constant 0 : i32
    %c0_i32_1 = arith.constant 0 : i32
    return %c0_i32, %c0_i32_0 : i32, i32
  }
  func.func @transform_3(%arg0: i32) -> (i32, i32) {
    %c0_i32 = arith.constant 0 : i32
    %c0_i32_0 = arith.constant 0 : i32
    %c0_i32_1 = arith.constant 0 : i32
    return %c0_i32, %c0_i32_0 : i32, i32
  }
  func.func @transform_4(%arg0: i32) -> (i32, i32) {
    %c0_i32 = arith.constant 0 : i32
    %c0_i32_0 = arith.constant 0 : i32
    %c0_i32_1 = arith.constant 0 : i32
    return %c0_i32, %c0_i32_0 : i32, i32
  }
  func.func @transform_5(%arg0: i32) -> (i32, i32) {
    %c0_i32 = arith.constant 0 : i32
    %c0_i32_0 = arith.constant 0 : i32
    %c0_i32_1 = arith.constant 0 : i32
    return %c0_i32, %c0_i32_0 : i32, i32
  }
  func.func @transform_6(%arg0: i32) -> (i32, i32) {
    %c0_i32 = arith.constant 0 : i32
    %c0_i32_0 = arith.constant 0 : i32
    %c0_i32_1 = arith.constant 0 : i32
    return %c0_i32, %c0_i32_0 : i32, i32
  }
  func.func @transform_7(%arg0: i32) -> (i32, i32) {
    %c0_i32 = arith.constant 0 : i32
    %c0_i32_0 = arith.constant 0 : i32
    %c0_i32_1 = arith.constant 0 : i32
    return %c0_i32, %c0_i32_0 : i32, i32
  }
  func.func @transform_8(%arg0: i32) -> (i32, i32) {
    %c0_i32 = arith.constant 0 : i32
    %c0_i32_0 = arith.constant 0 : i32
    %c0_i32_1 = arith.constant 0 : i32
    return %c0_i32, %c0_i32_0 : i32, i32
  }
  func.func @transform_9(%arg0: i32) -> (i32, i32) {
    %c0_i32 = arith.constant 0 : i32
    %c0_i32_0 = arith.constant 0 : i32
    return %c0_i32, %arg0 : i32, i32
  }
}

</mosaic_0001>

<llo_original>
// kernel: video_vae_forward.1
$region0: #{video_vae_forward.1}
  #allocation0 [shape = 'u32[]', space=smem, size = 0x4, offset = 0x4, fixed_abs, tag = 'smem constant byte address 0x4 - core index']
  #allocation1 [shape = 'u32[144,128]{1,0:T(1,128)}', space=vmem, size = 0x12000, scoped, tag = 'internal scratch']
  %s0 = inlined_call_operand.vmem [shape: bf16[128,96], index: 0, kind: input, shape index: {}]
  %s1 = inlined_call_operand.vmem [shape: bf16[96,32], index: 1, kind: input, shape index: {}]
  %s2 = inlined_call_operand.vmem [shape: f32[1,32], index: 2, kind: input, shape index: {}]
  %s3 = inlined_call_operand.vmem [shape: f32[1,32], index: 3, kind: input, shape index: {}]
  %s4 = inlined_call_operand.vmem [shape: f32[1,32], index: 4, kind: input, shape index: {}]
  %s5 = inlined_call_operand.vmem [shape: f32[1,32], index: 5, kind: input, shape index: {}]
  %s6 = inlined_call_operand.vmem [shape: f32[1,32], index: 6, kind: input, shape index: {}]
  %s7 = inlined_call_operand.vmem [shape: f32[4,32], index: 7, kind: input, shape index: {}]
  %s8 = inlined_call_operand.vmem [shape: f32[4,1], index: 8, kind: input, shape index: {}]
  %s9 = inlined_call_operand.vmem [shape: f32[4,128], index: 9, kind: output, shape index: {}]
  %s10 = sld [smem:[#allocation0]]
  $region46: #{video_vae_forward.1} parent=0
    _
  %s12 = ssub.s32 1, %s10
  %s13 = scalar_select 0, %s12, %s10
  // Predicated region
  $region2: #{video_vae_forward.1} parent=0 // pred_check
    _
  $region3: #{video_vae_forward.1} parent=0 // pred_check_branch
    %15 = sbr.rel (0) target = $region5
  $region4: #{video_vae_forward.1} parent=0 // pred_region
    _
  $region5: #{video_vae_forward.1} parent=0 // pred_fallthru
    _
  // Predicated region
  $region6: #{video_vae_forward.1} parent=0 // pred_check
    _
  $region7: #{video_vae_forward.1} parent=0 // pred_check_branch
    %17 = sbr.rel (0) target = $region9
  $region8: #{video_vae_forward.1} parent=0 // pred_region
    _
  $region9: #{video_vae_forward.1} parent=0 // pred_fallthru
    _
  // Predicated region
  $region10: #{video_vae_forward.1} parent=0 // pred_check
    _
  $region11: #{video_vae_forward.1} parent=0 // pred_check_branch
    %19 = sbr.rel (0) target = $region13
  $region12: #{video_vae_forward.1} parent=0 // pred_region
    _
  $region13: #{video_vae_forward.1} parent=0 // pred_fallthru
    _
  // Predicated region
  $region14: #{video_vae_forward.1} parent=0 // pred_check
    _
  $region15: #{video_vae_forward.1} parent=0 // pred_check_branch
    %21 = sbr.rel (0) target = $region17
  $region16: #{video_vae_forward.1} parent=0 // pred_region
    _
  $region17: #{video_vae_forward.1} parent=0 // pred_fallthru
    _
  // Predicated region
  $region18: #{video_vae_forward.1} parent=0 // pred_check
    _
  $region19: #{video_vae_forward.1} parent=0 // pred_check_branch
    %23 = sbr.rel (0) target = $region21
  $region20: #{video_vae_forward.1} parent=0 // pred_region
    _
  $region21: #{video_vae_forward.1} parent=0 // pred_fallthru
    _
  // Predicated region
  $region22: #{video_vae_forward.1} parent=0 // pred_check
    _
  $region23: #{video_vae_forward.1} parent=0 // pred_check_branch
    %25 = sbr.rel (0) target = $region25
  $region24: #{video_vae_forward.1} parent=0 // pred_region
    _
  $region25: #{video_vae_forward.1} parent=0 // pred_fallthru
    _
  // Predicated region
  $region26: #{video_vae_forward.1} parent=0 // pred_check
    _
  $region27: #{video_vae_forward.1} parent=0 // pred_check_branch
    %27 = sbr.rel (0) target = $region29
  $region28: #{video_vae_forward.1} parent=0 // pred_region
    _
  $region29: #{video_vae_forward.1} parent=0 // pred_fallthru
    _
  // Predicated region
  $region30: #{video_vae_forward.1} parent=0 // pred_check
    _
  $region31: #{video_vae_forward.1} parent=0 // pred_check_branch
    %29 = sbr.rel (0) target = $region33
  $region32: #{video_vae_forward.1} parent=0 // pred_region
    _
  $region33: #{video_vae_forward.1} parent=0 // pred_fallthru
    _
  // Predicated region
  $region34: #{video_vae_forward.1} parent=0 // pred_check
    _
  $region35: #{video_vae_forward.1} parent=0 // pred_check_branch
    %31 = sbr.rel (0) target = $region37
  $region36: #{video_vae_forward.1} parent=0 // pred_region
    _
  $region37: #{video_vae_forward.1} parent=0 // pred_fallthru
    _
  %v33 = vld [vmem:[%s2] sm:$0x1]
  %v34 = vld [vmem:[%s3] sm:$0x1]
  %v35 = vld [vmem:[%s4] sm:$0x1]
  %v36 = vld [vmem:[%s5] sm:$0x1]
  %v37 = vld [vmem:[%s6] sm:$0x1]
  %v38 = vld [vmem:[%s7] sm:$0xf]
  %v39 = vld [vmem:[%s8] sm:$0xf]
  %v40 = vld [vmem:[%s0] sm:$0xf]
  %v41 = vld [vmem:[%s0 + $0x4] sm:$0xf]
  %v42 = vld [vmem:[%s0 + $0x8] sm:$0xf]
  %v43 = vld [vmem:[%s0 + $0xc] sm:$0xf]
  %v44 = vld [vmem:[%s0 + $0x10] sm:$0xf]
  %v45 = vld [vmem:[%s0 + $0x14] sm:$0xf]
  %v46 = vld [vmem:[%s0 + $0x18] sm:$0xf]
  %v47 = vld [vmem:[%s0 + $0x1c] sm:$0xf]
  %v48 = vld [vmem:[%s0 + $0x20] sm:$0xf]
  %v49 = vld [vmem:[%s0 + $0x24] sm:$0xf]
  %v50 = vld [vmem:[%s0 + $0x28] sm:$0xf]
  %v51 = vld [vmem:[%s0 + $0x2c] sm:$0xf]
  %v52 = vld [vmem:[%s0 + $0x30] sm:$0xf]
  %v53 = vld [vmem:[%s0 + $0x34] sm:$0xf]
  %v54 = vld [vmem:[%s0 + $0x38] sm:$0xf]
  %v55 = vld [vmem:[%s0 + $0x3c] sm:$0xf]
  %v56 = vld [vmem:[%s1] sm:$0xf]
  %v57 = vld [vmem:[%s1 + $0x4] sm:$0xf]
  %v58 = vld [vmem:[%s1 + $0x8] sm:$0xf]
  %v59 = vld [vmem:[%s1 + $0xc] sm:$0xf]
  %v60 = vld [vmem:[%s1 + $0x10] sm:$0xf]
  %v61 = vld [vmem:[%s1 + $0x14] sm:$0xf]
  %v62 = vld [vmem:[%s1 + $0x18] sm:$0xf]
  %v63 = vld [vmem:[%s1 + $0x1c] sm:$0xf]
  %v64 = vld [vmem:[%s1 + $0x20] sm:$0xf]
  %v65 = vld [vmem:[%s1 + $0x24] sm:$0xf]
  %v66 = vld [vmem:[%s1 + $0x28] sm:$0xf]
  %v67 = vld [vmem:[%s1 + $0x2c] sm:$0xf]
  %v69 = vlaneseq
  %v70 = vshrl.u32 %v69, 7
  %v71 = vsub.s32 0, %v70
  %v72 = vrot.slane %v33, %v71
  %v90 = vunpack.c.l.b16 %v40
  %v91 = vunpack.c.l.b16 %v41
  %v92 = vunpack.c.l.b16 %v42
  %v93 = vunpack.c.l.b16 %v43
  %v94 = vunpack.c.l.b16 %v44
  %v95 = vunpack.c.l.b16 %v45
  %v96 = vunpack.c.l.b16 %v46
  %v97 = vunpack.c.l.b16 %v47
  %v98 = vunpack.c.l.b16 %v48
  %v99 = vunpack.c.l.b16 %v49
  %v100 = vunpack.c.l.b16 %v50
  %v101 = vunpack.c.l.b16 %v51
  %v102 = vunpack.c.l.b16 %v52
  %v103 = vunpack.c.l.b16 %v53
  %v104 = vunpack.c.l.b16 %v54
  %v105 = vunpack.c.l.b16 %v55
  %v106 = vpack.c.b16 %v91, %v90
  %v107 = vpack.c.b16 %v93, %v92
  %v108 = vpack.c.b16 %v95, %v94
  %v109 = vpack.c.b16 %v97, %v96
  %v110 = vpack.c.b16 %v99, %v98
  %v111 = vpack.c.b16 %v101, %v100
  %v112 = vpack.c.b16 %v103, %v102
  %v113 = vpack.c.b16 %v105, %v104
  %v126 = vunpack.c.l.b16 %v56
  %v127 = vunpack.c.l.b16 %v57
  %v128 = vunpack.c.l.b16 %v58
  %v129 = vunpack.c.l.b16 %v59
  %v130 = vunpack.c.l.b16 %v60
  %v131 = vunpack.c.l.b16 %v61
  %v132 = vunpack.c.l.b16 %v62
  %v133 = vunpack.c.l.b16 %v63
  %v134 = vunpack.c.l.b16 %v64
  %v135 = vunpack.c.l.b16 %v65
  %v136 = vunpack.c.l.b16 %v66
  %v137 = vunpack.c.l.b16 %v67
  %v138 = vpack.c.b16 %v127, %v126
  %v139 = vpack.c.b16 %v129, %v128
  %v140 = vpack.c.b16 %v131, %v130
  %v141 = vpack.c.b16 %v133, %v132
  %v142 = vpack.c.b16 %v135, %v134
  %v143 = vpack.c.b16 %v137, %v136
  %vm150 = vcmask 785408
  %v152 = vsel %vm150, %v106, 0
  %v155 = vsel %vm150, %v107, 0
  %v158 = vsel %vm150, %v108, 0
  %v161 = vsel %vm150, %v109, 0
  %v164 = vsel %vm150, %v110, 0
  %v167 = vsel %vm150, %v111, 0
  %v170 = vsel %vm150, %v112, 0
  %v173 = vsel %vm150, %v113, 0
  %175 = vmatprep.subr.bf16.mxu0 0
  %176 = vmatpush1.bf16.msra.mxu0 %v138
  %177 = vmatprep.subr.bf16.mxu0 0
  %178 = vmatpush1.bf16.msra.mxu0 %v139
  %179 = vmatprep.subr.bf16.mxu0 0
  %180 = vmatpush1.bf16.msra.mxu0 %v140
  %181 = vmatprep.subr.bf16.mxu0 0
  %182 = vmatpush1.bf16.msra.mxu0 %v141
  %183 = vmatprep.subr.bf16.mxu0 0
  %184 = vmatpush1.bf16.msra.mxu0 %v142
  %185 = vmatprep.subr.bf16.mxu0 0
  %186 = vmatpush1.bf16.msra.mxu0 %v143
  %187 = vmatprep.subr.bf16.mxu0 0
  %188 = vmatpush1.bf16.msra.mxu0 0
  %189 = vmatprep.subr.bf16.mxu0 0
  %190 = vmatpush1.bf16.msra.mxu0 0
  %191 = vmatprep.subr.bf16.mxu0 0
  %192 = vmatpush1.bf16.msra.mxu0 0
  %193 = vmatprep.subr.bf16.mxu0 0
  %194 = vmatpush1.bf16.msra.mxu0 0
  %195 = vmatprep.subr.bf16.mxu0 0
  %196 = vmatpush1.bf16.msra.mxu0 0
  %197 = vmatprep.subr.bf16.mxu0 0
  %198 = vmatpush1.bf16.msra.mxu0 0
  %199 = vmatprep.subr.bf16.mxu0 0
  %200 = vmatpush1.bf16.msra.mxu0 0
  %201 = vmatprep.subr.bf16.mxu0 0
  %202 = vmatpush1.bf16.msra.mxu0 0
  %203 = vmatprep.subr.bf16.mxu0 0
  %204 = vmatpush1.bf16.msra.mxu0 0
  %205 = vmatprep.subr.bf16.mxu0 0
  %206 = vmatpush1.bf16.msra.mxu0 0
  %207 = vmatprep.mubr.bf16.mxu0 0
  %208 = vmatmul.mubr.bf16.gmra.mrb[0].mxu0 %v152
  %v209 = vpop.f32.mrb[0].mxu0
  %v210 = vadd.f32 %v72, %v209
  %v211 = vpop.f32.mrb[0].mxu0
  %v212 = vpop.f32.mrb[0].mxu0
  %v213 = vadd.f32 %v72, %v212
  %v214 = vpop.f32.mrb[0].mxu0
  %215 = vmatprep.mubr.bf16.mxu0 0
  %216 = vmatmul.mubr.bf16.gmra.mrb[0].mxu0 %v155
  %v217 = vpop.f32.mrb[0].mxu0
  %v218 = vadd.f32 %v72, %v217
  %v219 = vpop.f32.mrb[0].mxu0
  %v220 = vpop.f32.mrb[0].mxu0
  %v221 = vadd.f32 %v72, %v220
  %v222 = vpop.f32.mrb[0].mxu0
  %223 = vmatprep.mubr.bf16.mxu0 0
  %224 = vmatmul.mubr.bf16.gmra.mrb[0].mxu0 %v158
  %v225 = vpop.f32.mrb[0].mxu0
  %v226 = vadd.f32 %v72, %v225
  %v227 = vpop.f32.mrb[0].mxu0
  %v228 = vpop.f32.mrb[0].mxu0
  %v229 = vadd.f32 %v72, %v228
  %v230 = vpop.f32.mrb[0].mxu0
  %231 = vmatprep.mubr.bf16.mxu0 0
  %232 = vmatmul.mubr.bf16.gmra.mrb[0].mxu0 %v161
  %v233 = vpop.f32.mrb[0].mxu0
  %v234 = vadd.f32 %v72, %v233
  %v235 = vpop.f32.mrb[0].mxu0
  %v236 = vpop.f32.mrb[0].mxu0
  %v237 = vadd.f32 %v72, %v236
  %v238 = vpop.f32.mrb[0].mxu0
  %239 = vmatprep.mubr.bf16.mxu0 0
  %240 = vmatmul.mubr.bf16.gmra.mrb[0].mxu0 %v164
  %v241 = vpop.f32.mrb[0].mxu0
  %v242 = vadd.f32 %v72, %v241
  %v243 = vpop.f32.mrb[0].mxu0
  %v244 = vpop.f32.mrb[0].mxu0
  %v245 = vadd.f32 %v72, %v244
  %v246 = vpop.f32.mrb[0].mxu0
  %247 = vmatprep.mubr.bf16.mxu0 0
  %248 = vmatmul.mubr.bf16.gmra.mrb[0].mxu0 %v167
  %v249 = vpop.f32.mrb[0].mxu0
  %v250 = vadd.f32 %v72, %v249
  %v251 = vpop.f32.mrb[0].mxu0
  %v252 = vpop.f32.mrb[0].mxu0
  %v253 = vadd.f32 %v72, %v252
  %v254 = vpop.f32.mrb[0].mxu0
  %255 = vmatprep.mubr.bf16.mxu0 0
  %256 = vmatmul.mubr.bf16.gmra.mrb[0].mxu0 %v170
  %v257 = vpop.f32.mrb[0].mxu0
  %v258 = vadd.f32 %v72, %v257
  %v259 = vpop.f32.mrb[0].mxu0
  %v260 = vpop.f32.mrb[0].mxu0
  %v261 = vadd.f32 %v72, %v260
  %v262 = vpop.f32.mrb[0].mxu0
  %263 = vmatprep.mubr.bf16.mxu0 0
  %264 = vmatmul.mubr.bf16.gmra.mrb[0].mxu0 %v173
  %v265 = vpop.f32.mrb[0].mxu0
  %v266 = vadd.f32 %v72, %v265
  %v267 = vpop.f32.mrb[0].mxu0
  %v268 = vpop.f32.mrb[0].mxu0
  %v269 = vadd.f32 %v72, %v268
  %v270 = vpop.f32.mrb[0].mxu0
  %271 = vdwg.mxu0
  %vm272 = vcmask 261120
  %v273 = vsel %vm272, %v210, 0.0
  %274 = vadd.xlane.f32.xlu0 %v273
  %v275 = vpop.xlane.xlu0 %274
  %v276 = vsel %vm272, %v213, 0.0
  %277 = vadd.xlane.f32.xlu0 %v276
  %v278 = vpop.xlane.xlu0 %277
  %v279 = vsel %vm272, %v218, 0.0
  %280 = vadd.xlane.f32.xlu0 %v279
  %v281 = vpop.xlane.xlu0 %280
  %v282 = vsel %vm272, %v221, 0.0
  %283 = vadd.xlane.f32.xlu0 %v282
  %v284 = vpop.xlane.xlu0 %283
  %v285 = vsel %vm272, %v226, 0.0
  %286 = vadd.xlane.f32.xlu0 %v285
  %v287 = vpop.xlane.xlu0 %286
  %v288 = vsel %vm272, %v229, 0.0
  %289 = vadd.xlane.f32.xlu0 %v288
  %v290 = vpop.xlane.xlu0 %289
  %v291 = vsel %vm272, %v234, 0.0
  %292 = vadd.xlane.f32.xlu0 %v291
  %v293 = vpop.xlane.xlu0 %292
  %v294 = vsel %vm272, %v237, 0.0
  %295 = vadd.xlane.f32.xlu0 %v294
  %v296 = vpop.xlane.xlu0 %295
  %v297 = vsel %vm272, %v242, 0.0
  %298 = vadd.xlane.f32.xlu0 %v297
  %v299 = vpop.xlane.xlu0 %298
  %v300 = vsel %vm272, %v245, 0.0
  %301 = vadd.xlane.f32.xlu0 %v300
  %v302 = vpop.xlane.xlu0 %301
  %v303 = vsel %vm272, %v250, 0.0
  %304 = vadd.xlane.f32.xlu0 %v303
  %v305 = vpop.xlane.xlu0 %304
  %v306 = vsel %vm272, %v253, 0.0
  %307 = vadd.xlane.f32.xlu0 %v306
  %v308 = vpop.xlane.xlu0 %307
  %v309 = vsel %vm272, %v258, 0.0
  %310 = vadd.xlane.f32.xlu0 %v309
  %v311 = vpop.xlane.xlu0 %310
  %v312 = vsel %vm272, %v261, 0.0
  %313 = vadd.xlane.f32.xlu0 %v312
  %v314 = vpop.xlane.xlu0 %313
  %v315 = vsel %vm272, %v266, 0.0
  %316 = vadd.xlane.f32.xlu0 %v315
  %v317 = vpop.xlane.xlu0 %316
  %v318 = vsel %vm272, %v269, 0.0
  %319 = vadd.xlane.f32.xlu0 %v318
  %v320 = vpop.xlane.xlu0 %319
  %v321 = vrcp.pop 32.0
  %v322 = vmul.f32 %v275, %v321
  %v323 = vmul.f32 %v278, %v321
  %v324 = vmul.f32 %v281, %v321
  %v325 = vmul.f32 %v284, %v321
  %v326 = vmul.f32 %v287, %v321
  %v327 = vmul.f32 %v290, %v321
  %v328 = vmul.f32 %v293, %v321
  %v329 = vmul.f32 %v296, %v321
  %v330 = vmul.f32 %v299, %v321
  %v331 = vmul.f32 %v302, %v321
  %v332 = vmul.f32 %v305, %v321
  %v333 = vmul.f32 %v308, %v321
  %v334 = vmul.f32 %v311, %v321
  %v335 = vmul.f32 %v314, %v321
  %v336 = vmul.f32 %v317, %v321
  %v337 = vmul.f32 %v320, %v321
  %v338 = vsub.f32 %v210, %v322
  %v339 = vsub.f32 %v213, %v323
  %v340 = vsub.f32 %v218, %v324
  %v341 = vsub.f32 %v221, %v325
  %v342 = vsub.f32 %v226, %v326
  %v343 = vsub.f32 %v229, %v327
  %v344 = vsub.f32 %v234, %v328
  %v345 = vsub.f32 %v237, %v329
  %v346 = vsub.f32 %v242, %v330
  %v347 = vsub.f32 %v245, %v331
  %v348 = vsub.f32 %v250, %v332
  %v349 = vsub.f32 %v253, %v333
  %v350 = vsub.f32 %v258, %v334
  %v351 = vsub.f32 %v261, %v335
  %v352 = vsub.f32 %v266, %v336
  %v353 = vsub.f32 %v269, %v337
  %v354 = vmul.f32 %v338, %v338
  %v355 = vmul.f32 %v339, %v339
  %v356 = vmul.f32 %v340, %v340
  %v357 = vmul.f32 %v341, %v341
  %v358 = vmul.f32 %v342, %v342
  %v359 = vmul.f32 %v343, %v343
  %v360 = vmul.f32 %v344, %v344
  %v361 = vmul.f32 %v345, %v345
  %v362 = vmul.f32 %v346, %v346
  %v363 = vmul.f32 %v347, %v347
  %v364 = vmul.f32 %v348, %v348
  %v365 = vmul.f32 %v349, %v349
  %v366 = vmul.f32 %v350, %v350
  %v367 = vmul.f32 %v351, %v351
  %v368 = vmul.f32 %v352, %v352
  %v369 = vmul.f32 %v353, %v353
  %v370 = vsel %vm272, %v354, 0.0
  %371 = vadd.xlane.f32.xlu0 %v370
  %v372 = vpop.xlane.xlu0 %371
  %v373 = vsel %vm272, %v355, 0.0
  %374 = vadd.xlane.f32.xlu0 %v373
  %v375 = vpop.xlane.xlu0 %374
  %v376 = vsel %vm272, %v356, 0.0
  %377 = vadd.xlane.f32.xlu0 %v376
  %v378 = vpop.xlane.xlu0 %377
  %v379 = vsel %vm272, %v357, 0.0
  %380 = vadd.xlane.f32.xlu0 %v379
  %v381 = vpop.xlane.xlu0 %380
  %v382 = vsel %vm272, %v358, 0.0
  %383 = vadd.xlane.f32.xlu0 %v382
  %v384 = vpop.xlane.xlu0 %383
  %v385 = vsel %vm272, %v359, 0.0
  %386 = vadd.xlane.f32.xlu0 %v385
  %v387 = vpop.xlane.xlu0 %386
  %v388 = vsel %vm272, %v360, 0.0
  %389 = vadd.xlane.f32.xlu0 %v388
  %v390 = vpop.xlane.xlu0 %389
  %v391 = vsel %vm272, %v361, 0.0
  %392 = vadd.xlane.f32.xlu0 %v391
  %v393 = vpop.xlane.xlu0 %392
  %v394 = vsel %vm272, %v362, 0.0
  %395 = vadd.xlane.f32.xlu0 %v394
  %v396 = vpop.xlane.xlu0 %395
  %v397 = vsel %vm272, %v363, 0.0
  %398 = vadd.xlane.f32.xlu0 %v397
  %v399 = vpop.xlane.xlu0 %398
  %v400 = vsel %vm272, %v364, 0.0
  %401 = vadd.xlane.f32.xlu0 %v400
  %v402 = vpop.xlane.xlu0 %401
  %v403 = vsel %vm272, %v365, 0.0
  %404 = vadd.xlane.f32.xlu0 %v403
  %v405 = vpop.xlane.xlu0 %404
  %v406 = vsel %vm272, %v366, 0.0
  %407 = vadd.xlane.f32.xlu0 %v406
  %v408 = vpop.xlane.xlu0 %407
  %v409 = vsel %vm272, %v367, 0.0
  %410 = vadd.xlane.f32.xlu0 %v409
  %v411 = vpop.xlane.xlu0 %410
  %v412 = vsel %vm272, %v368, 0.0
  %413 = vadd.xlane.f32.xlu0 %v412
  %v414 = vpop.xlane.xlu0 %413
  %v415 = vsel %vm272, %v369, 0.0
  %416 = vadd.xlane.f32.xlu0 %v415
  %v417 = vpop.xlane.xlu0 %416
  %v418 = vmul.f32 %v372, %v321
  %v419 = vmul.f32 %v375, %v321
  %v420 = vmul.f32 %v378, %v321
  %v421 = vmul.f32 %v381, %v321
  %v422 = vmul.f32 %v384, %v321
  %v423 = vmul.f32 %v387, %v321
  %v424 = vmul.f32 %v390, %v321
  %v425 = vmul.f32 %v393, %v321
  %v426 = vmul.f32 %v396, %v321
  %v427 = vmul.f32 %v399, %v321
  %v428 = vmul.f32 %v402, %v321
  %v429 = vmul.f32 %v405, %v321
  %v430 = vmul.f32 %v408, %v321
  %v431 = vmul.f32 %v411, %v321
  %v432 = vmul.f32 %v414, %v321
  %v433 = vmul.f32 %v417, %v321
  %v434 = vadd.f32 %v418, 1e-05
  %v435 = vadd.f32 %v419, 1e-05
  %v436 = vadd.f32 %v420, 1e-05
  %v437 = vadd.f32 %v421, 1e-05
  %v438 = vadd.f32 %v422, 1e-05
  %v439 = vadd.f32 %v423, 1e-05
  %v440 = vadd.f32 %v424, 1e-05
  %v441 = vadd.f32 %v425, 1e-05
  %v442 = vadd.f32 %v426, 1e-05
  %v443 = vadd.f32 %v427, 1e-05
  %v444 = vadd.f32 %v428, 1e-05
  %v445 = vadd.f32 %v429, 1e-05
  %v446 = vadd.f32 %v430, 1e-05
  %v447 = vadd.f32 %v431, 1e-05
  %v448 = vadd.f32 %v432, 1e-05
  %v449 = vadd.f32 %v433, 1e-05
  %v450 = vrsqrt.pop %v434
  %v451 = vrsqrt.pop %v435
  %v452 = vrsqrt.pop %v436
  %v453 = vrsqrt.pop %v437
  %v454 = vrsqrt.pop %v438
  %v455 = vrsqrt.pop %v439
  %v456 = vrsqrt.pop %v440
  %v457 = vrsqrt.pop %v441
  %v458 = vrsqrt.pop %v442
  %v459 = vrsqrt.pop %v443
  %v460 = vrsqrt.pop %v444
  %v461 = vrsqrt.pop %v445
  %v462 = vrsqrt.pop %v446
  %v463 = vrsqrt.pop %v447
  %v464 = vrsqrt.pop %v448
  %v465 = vrsqrt.pop %v449
  %v466 = vmul.f32 %v338, %v450
  %v467 = vmul.f32 %v339, %v451
  %v468 = vmul.f32 %v340, %v452
  %v469 = vmul.f32 %v341, %v453
  %v470 = vmul.f32 %v342, %v454
  %v471 = vmul.f32 %v343, %v455
  %v472 = vmul.f32 %v344, %v456
  %v473 = vmul.f32 %v345, %v457
  %v474 = vmul.f32 %v346, %v458
  %v475 = vmul.f32 %v347, %v459
  %v476 = vmul.f32 %v348, %v460
  %v477 = vmul.f32 %v349, %v461
  %v478 = vmul.f32 %v350, %v462
  %v479 = vmul.f32 %v351, %v463
  %v480 = vmul.f32 %v352, %v464
  %v481 = vmul.f32 %v353, %v465
  %v483 = vlaneseq
  %v484 = vshrl.u32 %v483, 7
  %v485 = vsub.s32 0, %v484
  %v486 = vrot.slane %v34, %v485
  %v488 = vmul.f32 %v466, %v486
  %v489 = vmul.f32 %v467, %v486
  %v490 = vmul.f32 %v468, %v486
  %v491 = vmul.f32 %v469, %v486
  %v492 = vmul.f32 %v470, %v486
  %v493 = vmul.f32 %v471, %v486
  %v494 = vmul.f32 %v472, %v486
  %v495 = vmul.f32 %v473, %v486
  %v496 = vmul.f32 %v474, %v486
  %v497 = vmul.f32 %v475, %v486
  %v498 = vmul.f32 %v476, %v486
  %v499 = vmul.f32 %v477, %v486
  %v500 = vmul.f32 %v478, %v486
  %v501 = vmul.f32 %v479, %v486
  %v502 = vmul.f32 %v480, %v486
  %v503 = vmul.f32 %v481, %v486
  %v505 = vlaneseq
  %v506 = vshrl.u32 %v505, 7
  %v507 = vsub.s32 0, %v506
  %v508 = vrot.slane %v35, %v507
  %v510 = vadd.f32 %v488, %v508
  %v511 = vadd.f32 %v489, %v508
  %v512 = vadd.f32 %v490, %v508
  %v513 = vadd.f32 %v491, %v508
  %v514 = vadd.f32 %v492, %v508
  %v515 = vadd.f32 %v493, %v508
  %v516 = vadd.f32 %v494, %v508
  %v517 = vadd.f32 %v495, %v508
  %v518 = vadd.f32 %v496, %v508
  %v519 = vadd.f32 %v497, %v508
  %v520 = vadd.f32 %v498, %v508
  %v521 = vadd.f32 %v499, %v508
  %v522 = vadd.f32 %v500, %v508
  %v523 = vadd.f32 %v501, %v508
  %v524 = vadd.f32 %v502, %v508
  %v525 = vadd.f32 %v503, %v508
  %v526 = vsel %vm272, %v510, 0.0
  %527 = vadd.xlane.f32.xlu0 %v526
  %v528 = vpop.xlane.xlu0 %527
  %v529 = vsel %vm272, %v511, 0.0
  %530 = vadd.xlane.f32.xlu0 %v529
  %v531 = vpop.xlane.xlu0 %530
  %v532 = vsel %vm272, %v512, 0.0
  %533 = vadd.xlane.f32.xlu0 %v532
  %v534 = vpop.xlane.xlu0 %533
  %v535 = vsel %vm272, %v513, 0.0
  %536 = vadd.xlane.f32.xlu0 %v535
  %v537 = vpop.xlane.xlu0 %536
  %v538 = vsel %vm272, %v514, 0.0
  %539 = vadd.xlane.f32.xlu0 %v538
  %v540 = vpop.xlane.xlu0 %539
  %v541 = vsel %vm272, %v515, 0.0
  %542 = vadd.xlane.f32.xlu0 %v541
  %v543 = vpop.xlane.xlu0 %542
  %v544 = vsel %vm272, %v516, 0.0
  %545 = vadd.xlane.f32.xlu0 %v544
  %v546 = vpop.xlane.xlu0 %545
  %v547 = vsel %vm272, %v517, 0.0
  %548 = vadd.xlane.f32.xlu0 %v547
  %v549 = vpop.xlane.xlu0 %548
  %v550 = vsel %vm272, %v518, 0.0
  %551 = vadd.xlane.f32.xlu0 %v550
  %v552 = vpop.xlane.xlu0 %551
  %v553 = vsel %vm272, %v519, 0.0
  %554 = vadd.xlane.f32.xlu0 %v553
  %v555 = vpop.xlane.xlu0 %554
  %v556 = vsel %vm272, %v520, 0.0
  %557 = vadd.xlane.f32.xlu0 %v556
  %v558 = vpop.xlane.xlu0 %557
  %v559 = vsel %vm272, %v521, 0.0
  %560 = vadd.xlane.f32.xlu0 %v559
  %v561 = vpop.xlane.xlu0 %560
  %v562 = vsel %vm272, %v522, 0.0
  %563 = vadd.xlane.f32.xlu0 %v562
  %v564 = vpop.xlane.xlu0 %563
  %v565 = vsel %vm272, %v523, 0.0
  %566 = vadd.xlane.f32.xlu0 %v565
  %v567 = vpop.xlane.xlu0 %566
  %v568 = vsel %vm272, %v524, 0.0
  %569 = vadd.xlane.f32.xlu0 %v568
  %v570 = vpop.xlane.xlu0 %569
  %v571 = vsel %vm272, %v525, 0.0
  %572 = vadd.xlane.f32.xlu0 %v571
  %v573 = vpop.xlane.xlu0 %572
  %v574 = vmul.f32 %v528, %v321
  %v575 = vmul.f32 %v531, %v321
  %v576 = vmul.f32 %v534, %v321
  %v577 = vmul.f32 %v537, %v321
  %v578 = vmul.f32 %v540, %v321
  %v579 = vmul.f32 %v543, %v321
  %v580 = vmul.f32 %v546, %v321
  %v581 = vmul.f32 %v549, %v321
  %v582 = vmul.f32 %v552, %v321
  %v583 = vmul.f32 %v555, %v321
  %v584 = vmul.f32 %v558, %v321
  %v585 = vmul.f32 %v561, %v321
  %v586 = vmul.f32 %v564, %v321
  %v587 = vmul.f32 %v567, %v321
  %v588 = vmul.f32 %v570, %v321
  %v589 = vmul.f32 %v573, %v321
  %v590 = vsub.f32 %v510, %v574
  %v591 = vsub.f32 %v511, %v575
  %v592 = vsub.f32 %v512, %v576
  %v593 = vsub.f32 %v513, %v577
  %v594 = vsub.f32 %v514, %v578
  %v595 = vsub.f32 %v515, %v579
  %v596 = vsub.f32 %v516, %v580
  %v597 = vsub.f32 %v517, %v581
  %v598 = vsub.f32 %v518, %v582
  %v599 = vsub.f32 %v519, %v583
  %v600 = vsub.f32 %v520, %v584
  %v601 = vsub.f32 %v521, %v585
  %v602 = vsub.f32 %v522, %v586
  %v603 = vsub.f32 %v523, %v587
  %v604 = vsub.f32 %v524, %v588
  %v605 = vsub.f32 %v525, %v589
  %v606 = vmul.f32 %v590, %v590
  %v607 = vmul.f32 %v591, %v591
  %v608 = vmul.f32 %v592, %v592
  %v609 = vmul.f32 %v593, %v593
  %v610 = vmul.f32 %v594, %v594
  %v611 = vmul.f32 %v595, %v595
  %v612 = vmul.f32 %v596, %v596
  %v613 = vmul.f32 %v597, %v597
  %v614 = vmul.f32 %v598, %v598
  %v615 = vmul.f32 %v599, %v599
  %v616 = vmul.f32 %v600, %v600
  %v617 = vmul.f32 %v601, %v601
  %v618 = vmul.f32 %v602, %v602
  %v619 = vmul.f32 %v603, %v603
  %v620 = vmul.f32 %v604, %v604
  %v621 = vmul.f32 %v605, %v605
  %v622 = vsel %vm272, %v606, 0.0
  %623 = vadd.xlane.f32.xlu0 %v622
  %v624 = vpop.xlane.xlu0 %623
  %v625 = vsel %vm272, %v607, 0.0
  %626 = vadd.xlane.f32.xlu0 %v625
  %v627 = vpop.xlane.xlu0 %626
  %v628 = vsel %vm272, %v608, 0.0
  %629 = vadd.xlane.f32.xlu0 %v628
  %v630 = vpop.xlane.xlu0 %629
  %v631 = vsel %vm272, %v609, 0.0
  %632 = vadd.xlane.f32.xlu0 %v631
  %v633 = vpop.xlane.xlu0 %632
  %v634 = vsel %vm272, %v610, 0.0
  %635 = vadd.xlane.f32.xlu0 %v634
  %v636 = vpop.xlane.xlu0 %635
  %v637 = vsel %vm272, %v611, 0.0
  %638 = vadd.xlane.f32.xlu0 %v637
  %v639 = vpop.xlane.xlu0 %638
  %v640 = vsel %vm272, %v612, 0.0
  %641 = vadd.xlane.f32.xlu0 %v640
  %v642 = vpop.xlane.xlu0 %641
  %v643 = vsel %vm272, %v613, 0.0
  %644 = vadd.xlane.f32.xlu0 %v643
  %v645 = vpop.xlane.xlu0 %644
  %v646 = vsel %vm272, %v614, 0.0
  %647 = vadd.xlane.f32.xlu0 %v646
  %v648 = vpop.xlane.xlu0 %647
  %v649 = vsel %vm272, %v615, 0.0
  %650 = vadd.xlane.f32.xlu0 %v649
  %v651 = vpop.xlane.xlu0 %650
  %v652 = vsel %vm272, %v616, 0.0
  %653 = vadd.xlane.f32.xlu0 %v652
  %v654 = vpop.xlane.xlu0 %653
  %v655 = vsel %vm272, %v617, 0.0
  %656 = vadd.xlane.f32.xlu0 %v655
  %v657 = vpop.xlane.xlu0 %656
  %v658 = vsel %vm272, %v618, 0.0
  %659 = vadd.xlane.f32.xlu0 %v658
  %v660 = vpop.xlane.xlu0 %659
  %v661 = vsel %vm272, %v619, 0.0
  %662 = vadd.xlane.f32.xlu0 %v661
  %v663 = vpop.xlane.xlu0 %662
  %v664 = vsel %vm272, %v620, 0.0
  %665 = vadd.xlane.f32.xlu0 %v664
  %v666 = vpop.xlane.xlu0 %665
  %v667 = vsel %vm272, %v621, 0.0
  %668 = vadd.xlane.f32.xlu0 %v667
  %v669 = vpop.xlane.xlu0 %668
  %v670 = vmul.f32 %v624, %v321
  %v671 = vmul.f32 %v627, %v321
  %v672 = vmul.f32 %v630, %v321
  %v673 = vmul.f32 %v633, %v321
  %v674 = vmul.f32 %v636, %v321
  %v675 = vmul.f32 %v639, %v321
  %v676 = vmul.f32 %v642, %v321
  %v677 = vmul.f32 %v645, %v321
  %v678 = vmul.f32 %v648, %v321
  %v679 = vmul.f32 %v651, %v321
  %v680 = vmul.f32 %v654, %v321
  %v681 = vmul.f32 %v657, %v321
  %v682 = vmul.f32 %v660, %v321
  %v683 = vmul.f32 %v663, %v321
  %v684 = vmul.f32 %v666, %v321
  %v685 = vmul.f32 %v669, %v321
  %v686 = vadd.f32 %v670, 1e-05
  %v687 = vadd.f32 %v671, 1e-05
  %v688 = vadd.f32 %v672, 1e-05
  %v689 = vadd.f32 %v673, 1e-05
  %v690 = vadd.f32 %v674, 1e-05
  %v691 = vadd.f32 %v675, 1e-05
  %v692 = vadd.f32 %v676, 1e-05
  %v693 = vadd.f32 %v677, 1e-05
  %v694 = vadd.f32 %v678, 1e-05
  %v695 = vadd.f32 %v679, 1e-05
  %v696 = vadd.f32 %v680, 1e-05
  %v697 = vadd.f32 %v681, 1e-05
  %v698 = vadd.f32 %v682, 1e-05
  %v699 = vadd.f32 %v683, 1e-05
  %v700 = vadd.f32 %v684, 1e-05
  %v701 = vadd.f32 %v685, 1e-05
  %v702 = vrsqrt.pop %v686
  %v703 = vrsqrt.pop %v687
  %v704 = vrsqrt.pop %v688
  %v705 = vrsqrt.pop %v689
  %v706 = vrsqrt.pop %v690
  %v707 = vrsqrt.pop %v691
  %v708 = vrsqrt.pop %v692
  %v709 = vrsqrt.pop %v693
  %v710 = vrsqrt.pop %v694
  %v711 = vrsqrt.pop %v695
  %v712 = vrsqrt.pop %v696
  %v713 = vrsqrt.pop %v697
  %v714 = vrsqrt.pop %v698
  %v715 = vrsqrt.pop %v699
  %v716 = vrsqrt.pop %v700
  %v717 = vrsqrt.pop %v701
  %v718 = vmul.f32 %v590, %v702
  %v719 = vmul.f32 %v591, %v703
  %v720 = vmul.f32 %v592, %v704
  %v721 = vmul.f32 %v593, %v705
  %v722 = vmul.f32 %v594, %v706
  %v723 = vmul.f32 %v595, %v707
  %v724 = vmul.f32 %v596, %v708
  %v725 = vmul.f32 %v597, %v709
  %v726 = vmul.f32 %v598, %v710
  %v727 = vmul.f32 %v599, %v711
  %v728 = vmul.f32 %v600, %v712
  %v729 = vmul.f32 %v601, %v713
  %v730 = vmul.f32 %v602, %v714
  %v731 = vmul.f32 %v603, %v715
  %v732 = vmul.f32 %v604, %v716
  %v733 = vmul.f32 %v605, %v717
  %v735 = vlaneseq
  %v736 = vshrl.u32 %v735, 7
  %v737 = vsub.s32 0, %v736
  %v738 = vrot.slane %v36, %v737
  %v740 = vmul.f32 %v718, %v738
  %v741 = vmul.f32 %v719, %v738
  %v742 = vmul.f32 %v720, %v738
  %v743 = vmul.f32 %v721, %v738
  %v744 = vmul.f32 %v722, %v738
  %v745 = vmul.f32 %v723, %v738
  %v746 = vmul.f32 %v724, %v738
  %v747 = vmul.f32 %v725, %v738
  %v748 = vmul.f32 %v726, %v738
  %v749 = vmul.f32 %v727, %v738
  %v750 = vmul.f32 %v728, %v738
  %v751 = vmul.f32 %v729, %v738
  %v752 = vmul.f32 %v730, %v738
  %v753 = vmul.f32 %v731, %v738
  %v754 = vmul.f32 %v732, %v738
  %v755 = vmul.f32 %v733, %v738
  %v757 = vlaneseq
  %v758 = vshrl.u32 %v757, 7
  %v759 = vsub.s32 0, %v758
  %v760 = vrot.slane %v37, %v759
  %v762 = vadd.f32 %v740, %v760
  %v763 = vadd.f32 %v741, %v760
  %v764 = vadd.f32 %v742, %v760
  %v765 = vadd.f32 %v743, %v760
  %v766 = vadd.f32 %v744, %v760
  %v767 = vadd.f32 %v745, %v760
  %v768 = vadd.f32 %v746, %v760
  %v769 = vadd.f32 %v747, %v760
  %v770 = vadd.f32 %v748, %v760
  %v771 = vadd.f32 %v749, %v760
  %v772 = vadd.f32 %v750, %v760
  %v773 = vadd.f32 %v751, %v760
  %v774 = vadd.f32 %v752, %v760
  %v775 = vadd.f32 %v753, %v760
  %v776 = vadd.f32 %v754, %v760
  %v777 = vadd.f32 %v755, %v760
  %779 = vset.pattern.permute.xlu0 0
  %780 = vperm.xlu0 %779, %v39
  %v781 = vpop.permute.xlu0 %780
  %v784 = vsel %vm272, %v38, 0
  %v787 = vsel %vm272, %v762, 0
  %v790 = vsel %vm272, %v763, 0
  %v793 = vsel %vm272, %v764, 0
  %v796 = vsel %vm272, %v765, 0
  %v799 = vsel %vm272, %v766, 0
  %v802 = vsel %vm272, %v767, 0
  %v805 = vsel %vm272, %v768, 0
  %v808 = vsel %vm272, %v769, 0
  %v811 = vsel %vm272, %v770, 0
  %v814 = vsel %vm272, %v771, 0
  %v817 = vsel %vm272, %v772, 0
  %v820 = vsel %vm272, %v773, 0
  %v823 = vsel %vm272, %v774, 0
  %v826 = vsel %vm272, %v775, 0
  %v829 = vsel %vm272, %v776, 0
  %v832 = vsel %vm272, %v777, 0
  %834 = vmatprep.subr.mxu0 0.0
  %835 = vmatpush1.xpose.msra.mxu0 %v787
  %836 = vmatprep.subr.mxu0 0.0
  %837 = vmatpush1.xpose.msra.mxu0 %v790
  %838 = vmatprep.subr.mxu0 0.0
  %839 = vmatpush1.xpose.msra.mxu0 %v793
  %840 = vmatprep.subr.mxu0 0.0
  %841 = vmatpush1.xpose.msra.mxu0 %v796
  %842 = vmatprep.subr.mxu0 0.0
  %843 = vmatpush1.xpose.msra.mxu0 %v799
  %844 = vmatprep.subr.mxu0 0.0
  %845 = vmatpush1.xpose.msra.mxu0 %v802
  %846 = vmatprep.subr.mxu0 0.0
  %847 = vmatpush1.xpose.msra.mxu0 %v805
  %848 = vmatprep.subr.mxu0 0.0
  %849 = vmatpush1.xpose.msra.mxu0 %v808
  %850 = vmatprep.subr.mxu0 0.0
  %851 = vmatpush1.xpose.msra.mxu0 %v811
  %852 = vmatprep.subr.mxu0 0.0
  %853 = vmatpush1.xpose.msra.mxu0 %v814
  %854 = vmatprep.subr.mxu0 0.0
  %855 = vmatpush1.xpose.msra.mxu0 %v817
  %856 = vmatprep.subr.mxu0 0.0
  %857 = vmatpush1.xpose.msra.mxu0 %v820
  %858 = vmatprep.subr.mxu0 0.0
  %859 = vmatpush1.xpose.msra.mxu0 %v823
  %860 = vmatprep.subr.mxu0 0.0
  %861 = vmatpush1.xpose.msra.mxu0 %v826
  %862 = vmatprep.subr.mxu0 0.0
  %863 = vmatpush1.xpose.msra.mxu0 %v829
  %864 = vmatprep.subr.mxu0 0.0
  %865 = vmatpush1.xpose.msra.mxu0 %v832
  %866 = vmatprep.subr.mxu0 0.0
  %867 = vmatpush1.xpose.msra.mxu0 0.0
  %868 = vmatprep.subr.mxu0 0.0
  %869 = vmatpush1.xpose.msra.mxu0 0.0
  %870 = vmatprep.subr.mxu0 0.0
  %871 = vmatpush1.xpose.msra.mxu0 0.0
  %872 = vmatprep.subr.mxu0 0.0
  %873 = vmatpush1.xpose.msra.mxu0 0.0
  %874 = vmatprep.subr.mxu0 0.0
  %875 = vmatpush1.xpose.msra.mxu0 0.0
  %876 = vmatprep.subr.mxu0 0.0
  %877 = vmatpush1.xpose.msra.mxu0 0.0
  %878 = vmatprep.subr.mxu0 0.0
  %879 = vmatpush1.xpose.msra.mxu0 0.0
  %880 = vmatprep.subr.mxu0 0.0
  %881 = vmatpush1.xpose.msra.mxu0 0.0
  %882 = vmatprep.subr.mxu0 0.0
  %883 = vmatpush1.xpose.msra.mxu0 0.0
  %884 = vmatprep.subr.mxu0 0.0
  %885 = vmatpush1.xpose.msra.mxu0 0.0
  %886 = vmatprep.subr.mxu0 0.0
  %887 = vmatpush1.xpose.msra.mxu0 0.0
  %888 = vmatprep.subr.mxu0 0.0
  %889 = vmatpush1.xpose.msra.mxu0 0.0
  %890 = vmatprep.subr.mxu0 0.0
  %891 = vmatpush1.xpose.msra.mxu0 0.0
  %892 = vmatprep.subr.mxu0 0.0
  %893 = vmatpush1.xpose.msra.mxu0 0.0
  %894 = vmatprep.subr.mxu0 0.0
  %895 = vmatpush1.xpose.msra.mxu0 0.0
  %896 = vmatprep.subr.mxu0 0.0
  %897 = vmatpush1.xpose.msra.mxu0 0.0
  %898 = vmatprep.mubr.f32.mxu0 0.0
  %899 = vmatmul.mubr.f32.gmra.mrb[0].mxu0 %v784
  %v900 = vpop.f32.mrb[0].mxu0
  %v901 = vadd.f32 %v781, %v900
  %v902 = vpop.f32.mrb[0].mxu0
  %903 = vdwg.mxu0
  %904 = vst [vmem:[%s9] sm:$0xf] %v901
  // Predicated region
  $region38: #{video_vae_forward.1} parent=0 // pred_check
    _
  $region39: #{video_vae_forward.1} parent=0 // pred_check_branch
    %906 = sbr.rel (0) target = $region41
  $region40: #{video_vae_forward.1} parent=0 // pred_region
    _
  $region41: #{video_vae_forward.1} parent=0 // pred_fallthru
    _
  // Predicated region
  $region42: #{video_vae_forward.1} parent=0 // pred_check
    _
  $region43: #{video_vae_forward.1} parent=0 // pred_check_branch
    %908 = sbr.rel (0) target = $region45
  $region44: #{video_vae_forward.1} parent=0 // pred_region
    _
  $region45: #{video_vae_forward.1} parent=0 // pred_fallthru
    _

</llo_original>
